<compile_context>
chip_gen: v6e
topology: v6e:2x2x1
jax: 0.10.0
libtpu: 0.0.40
codegen_flags: <defaults>
</compile_context>

<pallas_src>
import functools
import math

import jax
import jax.numpy as jnp
from jax.experimental import pallas as pl
from jax.experimental.pallas import tpu as pltpu


def _round_up(x, m):
    return (x + m - 1) // m * m


def _nbytes(shape, dtype):
    return math.prod(shape) * jnp.dtype(dtype).itemsize


# --------------------------------------------------------------------------- #
# Kernel
# --------------------------------------------------------------------------- #
def _multi_head_kernel(x_ref, w1_ref, b1_ref, w2_ref, b2_ref, o_ref, *,
                       compute_dtype, approximate_gelu):
    x = x_ref[...]
    if compute_dtype is not None and x.dtype != jnp.dtype(compute_dtype):
        # Cast in-register under the DMA: x travels HBM->VMEM in its native
        # dtype, avoiding a separate XLA cast pass (extra read+write of x).
        x = x.astype(compute_dtype)

    # First (wide) matmul: (tm, d_model) @ (d_model, H*64), f32 accumulation.
    h = jnp.dot(x, w1_ref[...], preferred_element_type=jnp.float32)
    h = h + b1_ref[...]

    if approximate_gelu:
        # tanh-approx GELU in f32: the transcendental goes to the EUP slot on
        # every generation; f32 math because v5e has no bf16 VPU/EUP and it
        # keeps the bf16 fast path's error down.
        c = math.sqrt(2.0 / math.pi)
        h = 0.5 * h * (1.0 + jnp.tanh(c * (h + 0.044715 * (h * h * h))))
    else:
        # Exact (erf) GELU in f32 -- matches torch.nn.GELU() default.
        h = 0.5 * h * (1.0 + jax.lax.erf(h * (1.0 / math.sqrt(2.0))))

    # Cast only at the second-matmul input (MXU benefits; VPU math stayed f32).
    h = h.astype(w2_ref.dtype)

    # Second (block-diagonal) matmul, emitted transposed so the output block is
    # (H_pad, tm): token axis last => lane-dense stores.
    #   o[j, t] = sum_k w2_bd[k, j] * h[t, k]
    o = jax.lax.dot_general(
        w2_ref[...], h,
        dimension_numbers=(((0,), (1,)), ((), ())),
        preferred_element_type=jnp.float32)
    o = o + b2_ref[...]                         # b2: (H_pad, 1), broadcast
    o_ref[...] = o.astype(o_ref.dtype)


# --------------------------------------------------------------------------- #
# Parameter fusion (hoist/cache this when weights are static across calls)
# --------------------------------------------------------------------------- #
def fuse_multi_head_params(w1, b1, w2, b2, *, compute_dtype=None):
    """Fuse per-head weights into the kernel layout.

    w1: (H, d_model, 64), b1: (H, 64), w2: (H, 64), b2: (H,).
    Returns (w1_all, b1_all, w2_bd, b2_col) with the head/output dim padded to
    the minimal multiple of 8 sublanes.  This is several HBM-touching XLA ops;
    hoist it out of the hot path (e.g. under one jit / cached) for static
    weights.
    """
    num_heads, d_model, hidden = w1.shape
    h_pad = _round_up(num_heads, 8)
    w1_all = jnp.transpose(w1, (1, 0, 2)).reshape(d_model, num_heads * hidden)
    b1_all = b1.reshape(1, num_heads * hidden).astype(jnp.float32)
    # Block-diagonal second layer, built in the *weight* dtype.
    eye = jnp.eye(num_heads, h_pad, dtype=w2.dtype)              # (H, H_pad)
    w2_bd = (w2[:, :, None] * eye[:, None, :]).reshape(num_heads * hidden, h_pad)
    b2_col = jnp.zeros((h_pad, 1), jnp.float32).at[:num_heads, 0].set(
        b2.astype(jnp.float32))
    if compute_dtype is not None:
        w1_all = w1_all.astype(compute_dtype)
        w2_bd = w2_bd.astype(compute_dtype)
    return w1_all, b1_all, w2_bd, b2_col


# --------------------------------------------------------------------------- #
# Tile selection
# --------------------------------------------------------------------------- #
def _select_tile(n, d_model, x_itemsize, tm_hint):
    n8 = _round_up(max(n, 1), 8)
    if tm_hint is not None:
        tm = _round_up(max(8, int(tm_hint)), 8)
    else:
        # Scale the token tile with d_model so the x tile is ~2 MiB: big enough
        # to amortize the ~0.35 us per-grid-step overhead, small enough for the
        # double-buffered x/out blocks to fit v7x's 64 MiB VMEM.
        tm = _round_up((2 << 20) // max(1, d_model * x_itemsize), 128)
        tm = max(512, min(tm, 8192))
    # v7x has 2 TensorCores per chip: when there is enough work, cap tm so the
    # "parallel" grid axis has at least 2 steps.
    if n8 > 256:
        tm = min(tm, _round_up(pl.cdiv(n8, 2), 128))
    tm = min(tm, n8)
    if _round_up(n8, tm) != tm:
        # Multi-step grid: keep the lane-dense output block's last dim (and the
        # x block's sublane dim) 128-aligned.
        tm = _round_up(tm, 128)
    n_pad = _round_up(n8, tm)
    return tm, n_pad


# --------------------------------------------------------------------------- #
# Wrapper
# --------------------------------------------------------------------------- #
def multi_head_output_fused(x, w1_all, b1_all, w2_bd, b2_col, *, num_heads,
                            tm=None, compute_dtype=None,
                            approximate_gelu=False):
    *lead, d_model = x.shape
    out_dtype = x.dtype
    n = math.prod(lead)
    hid_all = w1_all.shape[1]
    h_pad = w2_bd.shape[1]

    # x stays in its native dtype; any bf16 cast happens inside the kernel.
    x2 = x.reshape(n, d_model)

    tm, n_pad = _select_tile(n, d_model, jnp.dtype(x2.dtype).itemsize, tm)
    if n_pad != n:
        x2 = jnp.pad(x2, ((0, n_pad - n), (0, 0)))
    grid = (n_pad // tm,)

    # --- VMEM budget / cost estimate -----------------------------------------
    x_block = _nbytes((tm, d_model), x2.dtype)
    out_block = _nbytes((h_pad, tm), out_dtype)
    weight_bytes = (_nbytes((d_model, hid_all), w1_all.dtype)
                    + _nbytes((1, hid_all), b1_all.dtype)
                    + _nbytes((hid_all, h_pad), w2_bd.dtype)
                    + _nbytes((h_pad, 1), b2_col.dtype))
    temp_bytes = 3 * _nbytes((tm, hid_all), jnp.float32)   # h / GELU / cast temps
    try:
        phys_vmem = pltpu.get_tpu_info().vmem_capacity_bytes
    except Exception:
        phys_vmem = 64 << 20                      # v7x per-TC VMEM (smallest)
    vmem_cap = max(32 << 20, phys_vmem - (16 << 20))   # leave compiler headroom

    cost = pl.CostEstimate(
        flops=2 * n_pad * d_model * hid_all + 2 * n_pad * hid_all * h_pad,
        transcendentals=(n_pad * hid_all) if approximate_gelu else 0,
        bytes_accessed=(_nbytes((n_pad, d_model), x2.dtype)
                        + weight_bytes
                        + _nbytes((h_pad, n_pad), out_dtype)))

    kernel = functools.partial(_multi_head_kernel,
                               compute_dtype=compute_dtype,
                               approximate_gelu=approximate_gelu)

    def _call(single_buffer_weights):
        # Weights/biases have constant index_maps (fetched once); single-buffer
        # them so the default double-buffer allocation doesn't waste VMEM.
        wmode = pl.Buffered(1) if single_buffer_weights else None
        w_mult = 1 if single_buffer_weights else 2
        vmem_est = (2 * (x_block + out_block) + w_mult * weight_bytes
                    + temp_bytes + (2 << 20))
        vmem_limit = int(min(vmem_cap, max(8 << 20, vmem_est)))
        in_specs = [
            pl.BlockSpec((tm, d_model), lambda i: (i, 0)),
            pl.BlockSpec((d_model, hid_all), lambda i: (0, 0),
                         pipeline_mode=wmode),
            pl.BlockSpec((1, hid_all), lambda i: (0, 0), pipeline_mode=wmode),
            pl.BlockSpec((hid_all, h_pad), lambda i: (0, 0),
                         pipeline_mode=wmode),
            pl.BlockSpec((h_pad, 1), lambda i: (0, 0), pipeline_mode=wmode),
        ]
        return pl.pallas_call(
            kernel,
            out_shape=jax.ShapeDtypeStruct((h_pad, n_pad), out_dtype),
            grid_spec=pltpu.PrefetchScalarGridSpec(
                num_scalar_prefetch=0,
                grid=grid,
                in_specs=in_specs,
                out_specs=pl.BlockSpec((h_pad, tm), lambda i: (0, i)),
            ),
            compiler_params=pltpu.CompilerParams(
                dimension_semantics=("parallel",),
                vmem_limit_bytes=vmem_limit),
            cost_estimate=cost,
        )(x2, w1_all, b1_all, w2_bd, b2_col)

    try:
        out_t = _call(True)
    except Exception:
        # Fallback: default double-buffering if Buffered(1) is not supported.
        out_t = _call(False)

    # NOTE: this transpose is an extra XLA pass (~8 B per output element of HBM
    # traffic); consumers that accept the (H, n) layout should use out_t
    # directly.
    out = out_t[:num_heads, :n].T               # (n, num_heads)
    return out.reshape(*lead, num_heads)


def multi_head_output(x, w1, b1, w2, b2, *, tm=None, compute_dtype=None,
                      approximate_gelu=False):
    """x: (..., d_model); w1: (H, d_model, 64); b1: (H, 64); w2: (H, 64); b2: (H,).

    Convenience wrapper.  For static weights, call fuse_multi_head_params()
    once and reuse the fused params with multi_head_output_fused().
    """
    params = fuse_multi_head_params(w1, b1, w2, b2, compute_dtype=compute_dtype)
    return multi_head_output_fused(x, *params, num_heads=w1.shape[0], tm=tm,
                                   compute_dtype=compute_dtype,
                                   approximate_gelu=approximate_gelu)


def _reference(x, w1, b1, w2, b2):
    # pure-JAX reference mirroring the PyTorch module (exact GELU)
    outs = []
    for h in range(w1.shape[0]):
        t = x @ w1[h] + b1[h]
        t = jax.nn.gelu(t, approximate=False)
        outs.append(t @ w2[h][:, None] + b2[h])
    return jnp.concatenate(outs, axis=-1)


if __name__ == "__main__":
    d_model, num_heads, hidden = 32, 4, 64

    key = jax.random.PRNGKey(0)
    kx, kx2, k1, k2, k3, k4 = jax.random.split(key, 6)

    # deterministic synthetic parameters (roughly PyTorch Linear init scale)
    w1 = jax.random.uniform(k1, (num_heads, d_model, hidden), jnp.float32,
                            -1.0 / math.sqrt(d_model), 1.0 / math.sqrt(d_model))
    b1 = jax.random.uniform(k2, (num_heads, hidden), jnp.float32,
                            -1.0 / math.sqrt(d_model), 1.0 / math.sqrt(d_model))
    w2 = jax.random.uniform(k3, (num_heads, hidden), jnp.float32,
                            -1.0 / math.sqrt(hidden), 1.0 / math.sqrt(hidden))
    b2 = jax.random.uniform(k4, (num_heads,), jnp.float32,
                            -1.0 / math.sqrt(hidden), 1.0 / math.sqrt(hidden))

    # --- Test 1: exact-GELU f32 path (matches torch.nn.GELU()), tiny shape ---
    x = jax.random.normal(kx, (2, 8, d_model), dtype=jnp.float32)
    out = jax.block_until_ready(multi_head_output(x, w1, b1, w2, b2))
    ref = _reference(x, w1, b1, w2, b2)
    assert out.shape == (2, 8, num_heads), out.shape
    assert jnp.allclose(out, ref, atol=1e-5, rtol=1e-5), \
        float(jnp.max(jnp.abs(out - ref)))

    # --- Test 2: fast path (tanh GELU in f32, bf16 matmul inputs via in-kernel
    # cast), explicit tm=128 -> multi-step grid with token padding (288 -> 3x128).
    xl = jax.random.normal(kx2, (2, 144, d_model), dtype=jnp.float32)
    out2 = jax.block_until_ready(
        multi_head_output(xl, w1, b1, w2, b2, tm=128,
                          compute_dtype=jnp.bfloat16, approximate_gelu=True))
    ref2 = _reference(xl, w1, b1, w2, b2)
    assert out2.shape == (2, 144, num_heads), out2.shape
    err2 = float(jnp.max(jnp.abs(out2 - ref2)))
    assert err2 < 5e-2, err2

    # --- Test 3: auto tile selection (exact GELU, f32), 288 tokens -> 2 steps.
    out3 = jax.block_until_ready(multi_head_output(xl, w1, b1, w2, b2))
    ref3 = _reference(xl, w1, b1, w2, b2)
    assert out3.shape == (2, 144, num_heads), out3.shape
    assert jnp.allclose(out3, ref3, atol=1e-5, rtol=1e-5), \
        float(jnp.max(jnp.abs(out3 - ref3)))

    print("KERNEL_OK")
</pallas_src>

<mosaic_0001>
module attributes {stable_mosaic.version = 11 : i64} {
  func.func @_multi_head_kernel(%arg0: i32, %arg1: memref<16x32xf32, #tpu.memory_space<vmem>>, %arg2: memref<32x256xf32, #tpu.memory_space<vmem>>, %arg3: memref<1x256xf32, #tpu.memory_space<vmem>>, %arg4: memref<256x8xf32, #tpu.memory_space<vmem>>, %arg5: memref<8x1xf32, #tpu.memory_space<vmem>>, %arg6: memref<8x16xf32, #tpu.memory_space<vmem>>) attributes {dimension_semantics = [#tpu.dimension_semantics<parallel>], iteration_bounds = array<i64: 1>, scalar_prefetch = 0 : i64, scratch_operands = 0 : i64, tpu.core_type = #tpu.core_type<tc>, window_params = [{transform_indices = @transform_0, window_bounds = array<i64: 16, 32>}, {pipeline_mode = #tpu.pipeline_mode<synchronous>, transform_indices = @transform_1, window_bounds = array<i64: 32, 256>}, {pipeline_mode = #tpu.pipeline_mode<synchronous>, transform_indices = @transform_2, window_bounds = array<i64: 1, 256>}, {pipeline_mode = #tpu.pipeline_mode<synchronous>, transform_indices = @transform_3, window_bounds = array<i64: 256, 8>}, {pipeline_mode = #tpu.pipeline_mode<synchronous>, transform_indices = @transform_4, window_bounds = array<i64: 8, 1>}, {transform_indices = @transform_5, window_bounds = array<i64: 8, 16>}]} {
    %c0 = arith.constant 0 : index
    %c0_0 = arith.constant 0 : index
    %0 = vector.load %arg1[%c0, %c0_0] : memref<16x32xf32, #tpu.memory_space<vmem>>, vector<16x32xf32>
    %c0_1 = arith.constant 0 : index
    %c0_2 = arith.constant 0 : index
    %1 = vector.load %arg2[%c0_1, %c0_2] : memref<32x256xf32, #tpu.memory_space<vmem>>, vector<32x256xf32>
    %cst = arith.constant dense<0.000000e+00> : vector<16x256xf32>
    %2 = tpu.matmul %0, %1, %cst {dimension_numbers = #tpu.dot_dimension_numbers<[1], [0], [0], [1], [0, 0, 1, 1], [], []>} : vector<16x32xf32>, vector<32x256xf32>, vector<16x256xf32> -> vector<16x256xf32>
    %c0_3 = arith.constant 0 : index
    %c0_4 = arith.constant 0 : index
    %3 = vector.load %arg3[%c0_3, %c0_4] : memref<1x256xf32, #tpu.memory_space<vmem>>, vector<1x256xf32>
    %4 = vector.broadcast %3 : vector<1x256xf32> to vector<16x256xf32>
    %5 = arith.addf %2, %4 : vector<16x256xf32>
    %cst_5 = arith.constant 5.000000e-01 : f32
    %6 = vector.broadcast %cst_5 : f32 to vector<16x256xf32>
    %7 = arith.mulf %6, %5 : vector<16x256xf32>
    %cst_6 = arith.constant 0.707106769 : f32
    %8 = vector.broadcast %cst_6 : f32 to vector<16x256xf32>
    %9 = arith.mulf %5, %8 : vector<16x256xf32>
    %10 = math.erf %9 : vector<16x256xf32>
    %cst_7 = arith.constant 1.000000e+00 : f32
    %11 = vector.broadcast %cst_7 : f32 to vector<16x256xf32>
    %12 = arith.addf %11, %10 : vector<16x256xf32>
    %13 = arith.mulf %7, %12 : vector<16x256xf32>
    %c0_8 = arith.constant 0 : index
    %c0_9 = arith.constant 0 : index
    %14 = vector.load %arg4[%c0_8, %c0_9] : memref<256x8xf32, #tpu.memory_space<vmem>>, vector<256x8xf32>
    %cst_10 = arith.constant dense<0.000000e+00> : vector<8x16xf32>
    %15 = tpu.matmul %14, %13, %cst_10 {dimension_numbers = #tpu.dot_dimension_numbers<[0], [1], [1], [0], [0, 1, 1, 0], [], []>} : vector<256x8xf32>, vector<16x256xf32>, vector<8x16xf32> -> vector<8x16xf32>
    %c0_11 = arith.constant 0 : index
    %c0_12 = arith.constant 0 : index
    %16 = vector.load %arg5[%c0_11, %c0_12] : memref<8x1xf32, #tpu.memory_space<vmem>>, vector<8x1xf32>
    %17 = vector.broadcast %16 : vector<8x1xf32> to vector<8x16xf32>
    %18 = arith.addf %15, %17 : vector<8x16xf32>
    %c0_13 = arith.constant 0 : index
    %c0_14 = arith.constant 0 : index
    %19 = vector.load %arg6[%c0_13, %c0_14] : memref<8x16xf32, #tpu.memory_space<vmem>>, vector<8x16xf32>
    tpu.vector_store %arg6[%c0_13, %c0_14], %18 {strides = array<i32>} : memref<8x16xf32, #tpu.memory_space<vmem>>, vector<8x16xf32>,
    return
  }
  func.func @transform_0(%arg0: i32) -> (i32, i32) {
    %c0_i32 = arith.constant 0 : i32
    %c0_i32_0 = arith.constant 0 : i32
    return %arg0, %c0_i32 : i32, i32
  }
  func.func @transform_1(%arg0: i32) -> (i32, i32) {
    %c0_i32 = arith.constant 0 : i32
    %c0_i32_0 = arith.constant 0 : i32
    %c0_i32_1 = arith.constant 0 : i32
    return %c0_i32, %c0_i32_0 : i32, i32
  }
  func.func @transform_2(%arg0: i32) -> (i32, i32) {
    %c0_i32 = arith.constant 0 : i32
    %c0_i32_0 = arith.constant 0 : i32
    %c0_i32_1 = arith.constant 0 : i32
    return %c0_i32, %c0_i32_0 : i32, i32
  }
  func.func @transform_3(%arg0: i32) -> (i32, i32) {
    %c0_i32 = arith.constant 0 : i32
    %c0_i32_0 = arith.constant 0 : i32
    %c0_i32_1 = arith.constant 0 : i32
    return %c0_i32, %c0_i32_0 : i32, i32
  }
  func.func @transform_4(%arg0: i32) -> (i32, i32) {
    %c0_i32 = arith.constant 0 : i32
    %c0_i32_0 = arith.constant 0 : i32
    %c0_i32_1 = arith.constant 0 : i32
    return %c0_i32, %c0_i32_0 : i32, i32
  }
  func.func @transform_5(%arg0: i32) -> (i32, i32) {
    %c0_i32 = arith.constant 0 : i32
    %c0_i32_0 = arith.constant 0 : i32
    return %c0_i32, %arg0 : i32, i32
  }
}

module attributes {stable_mosaic.version = 11 : i64} {
  func.func @_multi_head_kernel(%arg0: i32, %arg1: memref<16x32xf32, #tpu.memory_space<vmem>>, %arg2: memref<32x256xf32, #tpu.memory_space<vmem>>, %arg3: memref<1x256xf32, #tpu.memory_space<vmem>>, %arg4: memref<256x8xf32, #tpu.memory_space<vmem>>, %arg5: memref<8x1xf32, #tpu.memory_space<vmem>>, %arg6: memref<8x16xf32, #tpu.memory_space<vmem>>) attributes {dimension_semantics = [#tpu.dimension_semantics<parallel>], iteration_bounds = array<i64: 1>, scalar_prefetch = 0 : i64, scratch_operands = 0 : i64, tpu.core_type = #tpu.core_type<tc>, window_params = [{transform_indices = @transform_0, window_bounds = array<i64: 16, 32>}, {pipeline_mode = #tpu.pipeline_mode<synchronous>, transform_indices = @transform_1, window_bounds = array<i64: 32, 256>}, {pipeline_mode = #tpu.pipeline_mode<synchronous>, transform_indices = @transform_2, window_bounds = array<i64: 1, 256>}, {pipeline_mode = #tpu.pipeline_mode<synchronous>, transform_indices = @transform_3, window_bounds = array<i64: 256, 8>}, {pipeline_mode = #tpu.pipeline_mode<synchronous>, transform_indices = @transform_4, window_bounds = array<i64: 8, 1>}, {transform_indices = @transform_5, window_bounds = array<i64: 8, 16>}]} {
    %c0 = arith.constant 0 : index
    %c0_0 = arith.constant 0 : index
    %0 = vector.load %arg1[%c0, %c0_0] : memref<16x32xf32, #tpu.memory_space<vmem>>, vector<16x32xf32>
    %c0_1 = arith.constant 0 : index
    %c0_2 = arith.constant 0 : index
    %1 = vector.load %arg2[%c0_1, %c0_2] : memref<32x256xf32, #tpu.memory_space<vmem>>, vector<32x256xf32>
    %cst = arith.constant dense<0.000000e+00> : vector<16x256xf32>
    %2 = tpu.matmul %0, %1, %cst {dimension_numbers = #tpu.dot_dimension_numbers<[1], [0], [0], [1], [0, 0, 1, 1], [], []>} : vector<16x32xf32>, vector<32x256xf32>, vector<16x256xf32> -> vector<16x256xf32>
    %c0_3 = arith.constant 0 : index
    %c0_4 = arith.constant 0 : index
    %3 = vector.load %arg3[%c0_3, %c0_4] : memref<1x256xf32, #tpu.memory_space<vmem>>, vector<1x256xf32>
    %4 = vector.broadcast %3 : vector<1x256xf32> to vector<16x256xf32>
    %5 = arith.addf %2, %4 : vector<16x256xf32>
    %cst_5 = arith.constant 5.000000e-01 : f32
    %6 = vector.broadcast %cst_5 : f32 to vector<16x256xf32>
    %7 = arith.mulf %6, %5 : vector<16x256xf32>
    %cst_6 = arith.constant 0.707106769 : f32
    %8 = vector.broadcast %cst_6 : f32 to vector<16x256xf32>
    %9 = arith.mulf %5, %8 : vector<16x256xf32>
    %10 = math.erf %9 : vector<16x256xf32>
    %cst_7 = arith.constant 1.000000e+00 : f32
    %11 = vector.broadcast %cst_7 : f32 to vector<16x256xf32>
    %12 = arith.addf %11, %10 : vector<16x256xf32>
    %13 = arith.mulf %7, %12 : vector<16x256xf32>
    %c0_8 = arith.constant 0 : index
    %c0_9 = arith.constant 0 : index
    %14 = vector.load %arg4[%c0_8, %c0_9] : memref<256x8xf32, #tpu.memory_space<vmem>>, vector<256x8xf32>
    %cst_10 = arith.constant dense<0.000000e+00> : vector<8x16xf32>
    %15 = tpu.matmul %14, %13, %cst_10 {dimension_numbers = #tpu.dot_dimension_numbers<[0], [1], [1], [0], [0, 1, 1, 0], [], []>} : vector<256x8xf32>, vector<16x256xf32>, vector<8x16xf32> -> vector<8x16xf32>
    %c0_11 = arith.constant 0 : index
    %c0_12 = arith.constant 0 : index
    %16 = vector.load %arg5[%c0_11, %c0_12] : memref<8x1xf32, #tpu.memory_space<vmem>>, vector<8x1xf32>
    %17 = vector.broadcast %16 : vector<8x1xf32> to vector<8x16xf32>
    %18 = arith.addf %15, %17 : vector<8x16xf32>
    %c0_13 = arith.constant 0 : index
    %c0_14 = arith.constant 0 : index
    %19 = vector.load %arg6[%c0_13, %c0_14] : memref<8x16xf32, #tpu.memory_space<vmem>>, vector<8x16xf32>
    tpu.vector_store %arg6[%c0_13, %c0_14], %18 {strides = array<i32>} : memref<8x16xf32, #tpu.memory_space<vmem>>, vector<8x16xf32>,
    return
  }
  func.func @transform_0(%arg0: i32) -> (i32, i32) {
    %c0_i32 = arith.constant 0 : i32
    %c0_i32_0 = arith.constant 0 : i32
    return %arg0, %c0_i32 : i32, i32
  }
  func.func @transform_1(%arg0: i32) -> (i32, i32) {
    %c0_i32 = arith.constant 0 : i32
    %c0_i32_0 = arith.constant 0 : i32
    %c0_i32_1 = arith.constant 0 : i32
    return %c0_i32, %c0_i32_0 : i32, i32
  }
  func.func @transform_2(%arg0: i32) -> (i32, i32) {
    %c0_i32 = arith.constant 0 : i32
    %c0_i32_0 = arith.constant 0 : i32
    %c0_i32_1 = arith.constant 0 : i32
    return %c0_i32, %c0_i32_0 : i32, i32
  }
  func.func @transform_3(%arg0: i32) -> (i32, i32) {
    %c0_i32 = arith.constant 0 : i32
    %c0_i32_0 = arith.constant 0 : i32
    %c0_i32_1 = arith.constant 0 : i32
    return %c0_i32, %c0_i32_0 : i32, i32
  }
  func.func @transform_4(%arg0: i32) -> (i32, i32) {
    %c0_i32 = arith.constant 0 : i32
    %c0_i32_0 = arith.constant 0 : i32
    %c0_i32_1 = arith.constant 0 : i32
    return %c0_i32, %c0_i32_0 : i32, i32
  }
  func.func @transform_5(%arg0: i32) -> (i32, i32) {
    %c0_i32 = arith.constant 0 : i32
    %c0_i32_0 = arith.constant 0 : i32
    return %c0_i32, %arg0 : i32, i32
  }
}

</mosaic_0001>

<llo_original>
// kernel: tpu_custom_call.1
$region0: #{tpu_custom_call.1}
  #allocation0 [shape = 'u32[]', space=smem, size = 0x4, offset = 0x4, fixed_abs, tag = 'smem constant byte address 0x4 - core index']
  #allocation1 [shape = 'u32[144,128]{1,0:T(1,128)}', space=vmem, size = 0x12000, scoped, tag = 'internal scratch']
  %s0 = inlined_call_operand.vmem [shape: f32[16,32], index: 0, kind: input, shape index: {}]
  %s1 = inlined_call_operand.vmem [shape: f32[32,256], index: 1, kind: input, shape index: {}]
  %s2 = inlined_call_operand.vmem [shape: f32[1,256], index: 2, kind: input, shape index: {}]
  %s3 = inlined_call_operand.vmem [shape: f32[256,8], index: 3, kind: input, shape index: {}]
  %s4 = inlined_call_operand.vmem [shape: f32[8,1], index: 4, kind: input, shape index: {}]
  %s5 = inlined_call_operand.hbm [shape: f32[8,16], index: 5, kind: output, shape index: {}]
  %s6 = sld [smem:[#allocation0]]
  $region30: #{tpu_custom_call.1} parent=0
    _
  %s8 = ssub.s32 1, %s6
  %s9 = scalar_select 0, %s8, %s6
  $region1: #{tpu_custom_call.1} parent=0
    #allocation2 [shape = 'u8[4096]{0}', space=vmem, size = 0x1000, scoped, tag = 'output window, operand 0, single buffered']
    #allocation3 [shape = 's32[1]{0}', space=sflag, size = 0x4, scoped, tag = 'scoped memory for tpu_custom_call.1']
    %10 = vsyncpa [#allocation3], 0
    // Predicated region
    $region2: #{tpu_custom_call.1} parent=1 // pred_check
      _
    $region3: #{tpu_custom_call.1} parent=1 // pred_check_branch
      %12 = sbr.rel (0) target = $region5
    $region4: #{tpu_custom_call.1} parent=1 // pred_region
      _
    $region5: #{tpu_custom_call.1} parent=1 // pred_fallthru
      _
    // Predicated region
    $region6: #{tpu_custom_call.1} parent=1 // pred_check
      _
    $region7: #{tpu_custom_call.1} parent=1 // pred_check_branch
      %14 = sbr.rel (0) target = $region9
    $region8: #{tpu_custom_call.1} parent=1 // pred_region
      _
    $region9: #{tpu_custom_call.1} parent=1 // pred_fallthru
      _
    // Predicated region
    $region10: #{tpu_custom_call.1} parent=1 // pred_check
      _
    $region11: #{tpu_custom_call.1} parent=1 // pred_check_branch
      %16 = sbr.rel (0) target = $region13
    $region12: #{tpu_custom_call.1} parent=1 // pred_region
      _
    $region13: #{tpu_custom_call.1} parent=1 // pred_fallthru
      _
    // Predicated region
    $region14: #{tpu_custom_call.1} parent=1 // pred_check
      _
    $region15: #{tpu_custom_call.1} parent=1 // pred_check_branch
      %18 = sbr.rel (0) target = $region17
    $region16: #{tpu_custom_call.1} parent=1 // pred_region
      _
    $region17: #{tpu_custom_call.1} parent=1 // pred_fallthru
      _
    // Predicated region
    $region18: #{tpu_custom_call.1} parent=1 // pred_check
      _
    $region19: #{tpu_custom_call.1} parent=1 // pred_check_branch
      %20 = sbr.rel (0) target = $region21
    $region20: #{tpu_custom_call.1} parent=1 // pred_region
      _
    $region21: #{tpu_custom_call.1} parent=1 // pred_fallthru
      _
    %v21 = vld [vmem:[%s0] sm:$0xff]
    %v22 = vld [vmem:[%s0 + $0x8] sm:$0xff]
    %v23 = vld [vmem:[%s1] sm:$0xff]
    %v24 = vld [vmem:[%s1 + $0x8] sm:$0xff]
    %v25 = vld [vmem:[%s1 + $0x10] sm:$0xff]
    %v26 = vld [vmem:[%s1 + $0x18] sm:$0xff]
    %v27 = vld [vmem:[%s1 + $0x20] sm:$0xff]
    %v28 = vld [vmem:[%s1 + $0x28] sm:$0xff]
    %v29 = vld [vmem:[%s1 + $0x30] sm:$0xff]
    %v30 = vld [vmem:[%s1 + $0x38] sm:$0xff]
    %v31 = vld [vmem:[%s2] sm:$0x3]
    %v33 = vlaneseq
    %v34 = vshrl.u32 %v33, 7
    %v35 = vsub.s32 0, %v34
    %v36 = vrot.slane %v31, %v35
    %v37 = vlaneseq
    %v38 = vshrl.u32 %v37, 7
    %v39 = vsub.s32 1, %v38
    %v40 = vrot.slane %v31, %v39
    %vm43 = vcmask 261120
    %v45 = vsel %vm43, %v21, 0
    %v48 = vsel %vm43, %v22, 0
    %50 = vmatprep.subr.mxu0 0.0
    %51 = vmatpush1.msra.mxu0 0.0
    %52 = vmatprep.subr.mxu0 0.0
    %53 = vmatpush1.msra.mxu0 0.0
    %54 = vmatprep.subr.mxu0 0.0
    %55 = vmatpush1.msra.mxu0 0.0
    %56 = vmatprep.subr.mxu0 0.0
    %57 = vmatpush1.msra.mxu0 0.0
    %58 = vmatprep.subr.mxu0 0.0
    %59 = vmatpush1.msra.mxu0 0.0
    %60 = vmatprep.subr.mxu0 0.0
    %61 = vmatpush1.msra.mxu0 0.0
    %62 = vmatprep.subr.mxu0 0.0
    %63 = vmatpush1.msra.mxu0 0.0
    %64 = vmatprep.subr.mxu0 0.0
    %65 = vmatpush1.msra.mxu0 0.0
    %66 = vmatprep.subr.mxu0 0.0
    %67 = vmatpush1.msra.mxu0 0.0
    %68 = vmatprep.subr.mxu0 0.0
    %69 = vmatpush1.msra.mxu0 0.0
    %70 = vmatprep.subr.mxu0 0.0
    %71 = vmatpush1.msra.mxu0 0.0
    %72 = vmatprep.subr.mxu0 0.0
    %73 = vmatpush1.msra.mxu0 0.0
    %74 = vmatprep.subr.mxu0 %v30
    %75 = vmatpush1.msra.mxu0 %v29
    %76 = vmatprep.subr.mxu0 %v28
    %77 = vmatpush1.msra.mxu0 %v27
    %78 = vmatprep.subr.mxu0 %v26
    %79 = vmatpush1.msra.mxu0 %v25
    %80 = vmatprep.subr.mxu0 %v24
    %81 = vmatpush1.msra.mxu0 %v23
    %82 = vmatprep.subr.mxu0 0.0
    %83 = vmatpush2.msra.mxu0 0.0
    %84 = vmatprep.subr.mxu0 0.0
    %85 = vmatpush2.msra.mxu0 0.0
    %86 = vmatprep.subr.mxu0 0.0
    %87 = vmatpush2.msra.mxu0 0.0
    %88 = vmatprep.subr.mxu0 0.0
    %89 = vmatpush2.msra.mxu0 0.0
    %90 = vmatprep.subr.mxu0 0.0
    %91 = vmatpush2.msra.mxu0 0.0
    %92 = vmatprep.subr.mxu0 0.0
    %93 = vmatpush2.msra.mxu0 0.0
    %94 = vmatprep.subr.mxu0 0.0
    %95 = vmatpush2.msra.mxu0 0.0
    %96 = vmatprep.subr.mxu0 0.0
    %97 = vmatpush2.msra.mxu0 0.0
    %98 = vmatprep.subr.mxu0 0.0
    %99 = vmatpush2.msra.mxu0 0.0
    %100 = vmatprep.subr.mxu0 0.0
    %101 = vmatpush2.msra.mxu0 0.0
    %102 = vmatprep.subr.mxu0 0.0
    %103 = vmatpush2.msra.mxu0 0.0
    %104 = vmatprep.subr.mxu0 0.0
    %105 = vmatpush2.msra.mxu0 0.0
    %106 = vmatprep.subr.mxu0 0.0
    %107 = vmatpush2.msra.mxu0 0.0
    %108 = vmatprep.subr.mxu0 0.0
    %109 = vmatpush2.msra.mxu0 0.0
    %110 = vmatprep.subr.mxu0 0.0
    %111 = vmatpush2.msra.mxu0 0.0
    %112 = vmatprep.subr.mxu0 0.0
    %113 = vmatpush2.msra.mxu0 0.0
    %114 = vmatprep.mubr.f32.mxu0 0.0
    %115 = vmatmul.mubr.f32.gmra.mxu0 %v45
    %v116 = vpop.f32.mrf.mxu0
    %v117 = vadd.f32 %v36, %v116
    %v118 = vpop.f32.mrf.mxu0
    %v119 = vadd.f32 %v40, %v118
    %120 = vmatprep.mubr.f32.mxu0 0.0
    %121 = vmatmul.mubr.f32.gmra.mxu0 %v48
    %v122 = vpop.f32.mrf.mxu0
    %v123 = vadd.f32 %v36, %v122
    %v124 = vpop.f32.mrf.mxu0
    %v125 = vadd.f32 %v40, %v124
    %126 = vdwg.mxu0
    %v127 = vmul.f32 %v117, 0.5
    %v128 = vmul.f32 %v119, 0.5
    %v129 = vmul.f32 %v123, 0.5
    %v130 = vmul.f32 %v125, 0.5
    %v131 = vmul.f32 %v117, 0.70710677
    %v132 = vmul.f32 %v119, 0.70710677
    %v133 = vmul.f32 %v123, 0.70710677
    %v134 = vmul.f32 %v125, 0.70710677
    %v135 = verf.f32.pop %v131
    %v136 = verf.f32.pop %v132
    %v137 = verf.f32.pop %v133
    %v138 = verf.f32.pop %v134
    %v139 = vadd.f32 %v135, 1.0
    %v140 = vadd.f32 %v136, 1.0
    %v141 = vadd.f32 %v137, 1.0
    %v142 = vadd.f32 %v138, 1.0
    %v143 = vmul.f32 %v127, %v139
    %v144 = vmul.f32 %v128, %v140
    %v145 = vmul.f32 %v129, %v141
    %v146 = vmul.f32 %v130, %v142
    %v147 = vld [vmem:[%s3] sm:$0xff]
    %v148 = vld [vmem:[%s3 + $0x8] sm:$0xff]
    %v149 = vld [vmem:[%s3 + $0x10] sm:$0xff]
    %v150 = vld [vmem:[%s3 + $0x18] sm:$0xff]
    %v151 = vld [vmem:[%s3 + $0x20] sm:$0xff]
    %v152 = vld [vmem:[%s3 + $0x28] sm:$0xff]
    %v153 = vld [vmem:[%s3 + $0x30] sm:$0xff]
    %v154 = vld [vmem:[%s3 + $0x38] sm:$0xff]
    %v155 = vld [vmem:[%s3 + $0x40] sm:$0xff]
    %v156 = vld [vmem:[%s3 + $0x48] sm:$0xff]
    %v157 = vld [vmem:[%s3 + $0x50] sm:$0xff]
    %v158 = vld [vmem:[%s3 + $0x58] sm:$0xff]
    %v159 = vld [vmem:[%s3 + $0x60] sm:$0xff]
    %v160 = vld [vmem:[%s3 + $0x68] sm:$0xff]
    %v161 = vld [vmem:[%s3 + $0x70] sm:$0xff]
    %v162 = vld [vmem:[%s3 + $0x78] sm:$0xff]
    %v163 = vld [vmem:[%s3 + $0x80] sm:$0xff]
    %v164 = vld [vmem:[%s3 + $0x88] sm:$0xff]
    %v165 = vld [vmem:[%s3 + $0x90] sm:$0xff]
    %v166 = vld [vmem:[%s3 + $0x98] sm:$0xff]
    %v167 = vld [vmem:[%s3 + $0xa0] sm:$0xff]
    %v168 = vld [vmem:[%s3 + $0xa8] sm:$0xff]
    %v169 = vld [vmem:[%s3 + $0xb0] sm:$0xff]
    %v170 = vld [vmem:[%s3 + $0xb8] sm:$0xff]
    %v171 = vld [vmem:[%s3 + $0xc0] sm:$0xff]
    %v172 = vld [vmem:[%s3 + $0xc8] sm:$0xff]
    %v173 = vld [vmem:[%s3 + $0xd0] sm:$0xff]
    %v174 = vld [vmem:[%s3 + $0xd8] sm:$0xff]
    %v175 = vld [vmem:[%s3 + $0xe0] sm:$0xff]
    %v176 = vld [vmem:[%s3 + $0xe8] sm:$0xff]
    %v177 = vld [vmem:[%s3 + $0xf0] sm:$0xff]
    %v178 = vld [vmem:[%s3 + $0xf8] sm:$0xff]
    %v179 = vld [vmem:[%s4] sm:$0xff]
    %181 = vset.pattern.permute.xlu0 0
    %182 = vperm.xlu0 %181, %v179
    %v183 = vpop.permute.xlu0 %182
    %185 = vxpose.xlu0.b32.start [1/16] %v147, 128
    %186 = vxpose.xlu0.b32.cont [2/16] %v148, 128
    %187 = vxpose.xlu0.b32.cont [3/16] %v149, 128
    %188 = vxpose.xlu0.b32.cont [4/16] %v150, 128
    %189 = vxpose.xlu0.b32.cont [5/16] %v151, 128
    %190 = vxpose.xlu0.b32.cont [6/16] %v152, 128
    %191 = vxpose.xlu0.b32.cont [7/16] %v153, 128
    %192 = vxpose.xlu0.b32.cont [8/16] %v154, 128
    %193 = vxpose.xlu0.b32.cont [9/16] %v155, 128
    %194 = vxpose.xlu0.b32.cont [10/16] %v156, 128
    %195 = vxpose.xlu0.b32.cont [11/16] %v157, 128
    %196 = vxpose.xlu0.b32.cont [12/16] %v158, 128
    %197 = vxpose.xlu0.b32.cont [13/16] %v159, 128
    %198 = vxpose.xlu0.b32.cont [14/16] %v160, 128
    %199 = vxpose.xlu0.b32.cont [15/16] %v161, 128
    %200 = vxpose.xlu0.b32.end [16/16] %v162, 128
    %v201 = vpop.trf.xlu0
    %v202 = vpop.trf.xlu0
    %v203 = vpop.trf.xlu0
    %v204 = vpop.trf.xlu0
    %v205 = vpop.trf.xlu0
    %v206 = vpop.trf.xlu0
    %v207 = vpop.trf.xlu0
    %v208 = vpop.trf.xlu0
    %v209 = vpop.trf.xlu0
    %v210 = vpop.trf.xlu0
    %v211 = vpop.trf.xlu0
    %v212 = vpop.trf.xlu0
    %v213 = vpop.trf.xlu0
    %v214 = vpop.trf.xlu0
    %v215 = vpop.trf.xlu0
    %v216 = vpop.trf.xlu0
    %217 = vxpose.xlu0.b32.start [1/16] %v163, 128
    %218 = vxpose.xlu0.b32.cont [2/16] %v164, 128
    %219 = vxpose.xlu0.b32.cont [3/16] %v165, 128
    %220 = vxpose.xlu0.b32.cont [4/16] %v166, 128
    %221 = vxpose.xlu0.b32.cont [5/16] %v167, 128
    %222 = vxpose.xlu0.b32.cont [6/16] %v168, 128
    %223 = vxpose.xlu0.b32.cont [7/16] %v169, 128
    %224 = vxpose.xlu0.b32.cont [8/16] %v170, 128
    %225 = vxpose.xlu0.b32.cont [9/16] %v171, 128
    %226 = vxpose.xlu0.b32.cont [10/16] %v172, 128
    %227 = vxpose.xlu0.b32.cont [11/16] %v173, 128
    %228 = vxpose.xlu0.b32.cont [12/16] %v174, 128
    %229 = vxpose.xlu0.b32.cont [13/16] %v175, 128
    %230 = vxpose.xlu0.b32.cont [14/16] %v176, 128
    %231 = vxpose.xlu0.b32.cont [15/16] %v177, 128
    %232 = vxpose.xlu0.b32.end [16/16] %v178, 128
    %v233 = vpop.trf.xlu0
    %v234 = vpop.trf.xlu0
    %v235 = vpop.trf.xlu0
    %v236 = vpop.trf.xlu0
    %v237 = vpop.trf.xlu0
    %v238 = vpop.trf.xlu0
    %v239 = vpop.trf.xlu0
    %v240 = vpop.trf.xlu0
    %v241 = vpop.trf.xlu0
    %v242 = vpop.trf.xlu0
    %v243 = vpop.trf.xlu0
    %v244 = vpop.trf.xlu0
    %v245 = vpop.trf.xlu0
    %v246 = vpop.trf.xlu0
    %v247 = vpop.trf.xlu0
    %v248 = vpop.trf.xlu0
    %249 = vmatprep.subr.mxu0 0.0
    %250 = vmatpush1.xpose.msra.mxu0 0.0
    %251 = vmatprep.subr.mxu0 0.0
    %252 = vmatpush1.xpose.msra.mxu0 0.0
    %253 = vmatprep.subr.mxu0 0.0
    %254 = vmatpush1.xpose.msra.mxu0 0.0
    %255 = vmatprep.subr.mxu0 0.0
    %256 = vmatpush1.xpose.msra.mxu0 0.0
    %257 = vmatprep.subr.mxu0 0.0
    %258 = vmatpush1.xpose.msra.mxu0 0.0
    %259 = vmatprep.subr.mxu0 0.0
    %260 = vmatpush1.xpose.msra.mxu0 0.0
    %261 = vmatprep.subr.mxu0 0.0
    %262 = vmatpush1.xpose.msra.mxu0 0.0
    %263 = vmatprep.subr.mxu0 0.0
    %264 = vmatpush1.xpose.msra.mxu0 0.0
    %265 = vmatprep.subr.mxu0 0.0
    %266 = vmatpush1.xpose.msra.mxu0 0.0
    %267 = vmatprep.subr.mxu0 0.0
    %268 = vmatpush1.xpose.msra.mxu0 0.0
    %269 = vmatprep.subr.mxu0 0.0
    %270 = vmatpush1.xpose.msra.mxu0 0.0
    %271 = vmatprep.subr.mxu0 0.0
    %272 = vmatpush1.xpose.msra.mxu0 0.0
    %273 = vmatprep.subr.mxu0 0.0
    %274 = vmatpush1.xpose.msra.mxu0 0.0
    %275 = vmatprep.subr.mxu0 0.0
    %276 = vmatpush1.xpose.msra.mxu0 0.0
    %277 = vmatprep.subr.mxu0 %v146
    %278 = vmatpush1.xpose.msra.mxu0 %v145
    %279 = vmatprep.subr.mxu0 %v144
    %280 = vmatpush1.xpose.msra.mxu0 %v143
    %281 = vmatprep.subr.mxu0 0.0
    %282 = vmatpush2.xpose.msra.mxu0 0.0
    %283 = vmatprep.subr.mxu0 0.0
    %284 = vmatpush2.xpose.msra.mxu0 0.0
    %285 = vmatprep.subr.mxu0 0.0
    %286 = vmatpush2.xpose.msra.mxu0 0.0
    %287 = vmatprep.subr.mxu0 0.0
    %288 = vmatpush2.xpose.msra.mxu0 0.0
    %289 = vmatprep.subr.mxu0 0.0
    %290 = vmatpush2.xpose.msra.mxu0 0.0
    %291 = vmatprep.subr.mxu0 0.0
    %292 = vmatpush2.xpose.msra.mxu0 0.0
    %293 = vmatprep.subr.mxu0 0.0
    %294 = vmatpush2.xpose.msra.mxu0 0.0
    %295 = vmatprep.subr.mxu0 0.0
    %296 = vmatpush2.xpose.msra.mxu0 0.0
    %297 = vmatprep.subr.mxu0 0.0
    %298 = vmatpush2.xpose.msra.mxu0 0.0
    %299 = vmatprep.subr.mxu0 0.0
    %300 = vmatpush2.xpose.msra.mxu0 0.0
    %301 = vmatprep.subr.mxu0 0.0
    %302 = vmatpush2.xpose.msra.mxu0 0.0
    %303 = vmatprep.subr.mxu0 0.0
    %304 = vmatpush2.xpose.msra.mxu0 0.0
    %305 = vmatprep.subr.mxu0 0.0
    %306 = vmatpush2.xpose.msra.mxu0 0.0
    %307 = vmatprep.subr.mxu0 0.0
    %308 = vmatpush2.xpose.msra.mxu0 0.0
    %309 = vmatprep.subr.mxu0 0.0
    %310 = vmatpush2.xpose.msra.mxu0 0.0
    %311 = vmatprep.subr.mxu0 0.0
    %312 = vmatpush2.xpose.msra.mxu0 0.0
    %313 = vmatprep.mubr.f32.mxu0 %v233
    %314 = vmatmul.mubr.f32.gmra.mxu0 %v201
    %v315 = vpop.f32.mrf.mxu0
    %v316 = vadd.f32 %v183, %v315
    %v317 = vpop.f32.mrf.mxu0
    %318 = vdwg.mxu0
    %vm319 = vcmask 130048
    %320 = vst.msk [vmem:[#allocation2] sm:$0xff] %vm319, %v316
    // Predicated region
    $region22: #{tpu_custom_call.1} parent=1 // pred_check
      _
    $region23: #{tpu_custom_call.1} parent=1 // pred_check_branch
      %322 = sbr.rel (0) target = $region25
    $region24: #{tpu_custom_call.1} parent=1 // pred_region
      %s324 = ssub.s32 128, 128
      %325 = vsyncadd [#allocation3], %s324
      %s327 = sshll.u32 [#allocation2], 4
      %s328 = int_to_ptr.vmem [resolvable:$true] %s327
      %330 = dma.vmem_to_hbm [thread:$0]  %s328, 128, %s5, [#allocation3]
    $region25: #{tpu_custom_call.1} parent=1 // pred_fallthru
      _
    // Predicated region
    $region26: #{tpu_custom_call.1} parent=1 // pred_check
      _
    $region27: #{tpu_custom_call.1} parent=1 // pred_check_branch
      %332 = sbr.rel (0) target = $region29
    $region28: #{tpu_custom_call.1} parent=1 // pred_region
      %333 = dma.done [#allocation3], 128
    $region29: #{tpu_custom_call.1} parent=1 // pred_fallthru
      _
    %334 = vsyncpa [#allocation3], 1

// kernel: tpu_custom_call.1
$region0: #{tpu_custom_call.1}
  #allocation0 [shape = 'u32[]', space=smem, size = 0x4, offset = 0x4, fixed_abs, tag = 'smem constant byte address 0x4 - core index']
  #allocation1 [shape = 'u32[144,128]{1,0:T(1,128)}', space=vmem, size = 0x12000, scoped, tag = 'internal scratch']
  %s0 = inlined_call_operand.vmem [shape: f32[16,32], index: 0, kind: input, shape index: {}]
  %s1 = inlined_call_operand.vmem [shape: f32[32,256], index: 1, kind: input, shape index: {}]
  %s2 = inlined_call_operand.vmem [shape: f32[1,256], index: 2, kind: input, shape index: {}]
  %s3 = inlined_call_operand.vmem [shape: f32[256,8], index: 3, kind: input, shape index: {}]
  %s4 = inlined_call_operand.vmem [shape: f32[8,1], index: 4, kind: input, shape index: {}]
  %s5 = inlined_call_operand.hbm [shape: f32[8,16], index: 5, kind: output, shape index: {}]
  %s6 = sld [smem:[#allocation0]]
  $region30: #{tpu_custom_call.1} parent=0
    _
  %s8 = ssub.s32 1, %s6
  %s9 = scalar_select 0, %s8, %s6
  $region1: #{tpu_custom_call.1} parent=0
    #allocation2 [shape = 'u8[4096]{0}', space=vmem, size = 0x1000, scoped, tag = 'output window, operand 0, single buffered']
    #allocation3 [shape = 's32[1]{0}', space=sflag, size = 0x4, scoped, tag = 'scoped memory for tpu_custom_call.1']
    %10 = vsyncpa [#allocation3], 0
    // Predicated region
    $region2: #{tpu_custom_call.1} parent=1 // pred_check
      _
    $region3: #{tpu_custom_call.1} parent=1 // pred_check_branch
      %12 = sbr.rel (0) target = $region5
    $region4: #{tpu_custom_call.1} parent=1 // pred_region
      _
    $region5: #{tpu_custom_call.1} parent=1 // pred_fallthru
      _
    // Predicated region
    $region6: #{tpu_custom_call.1} parent=1 // pred_check
      _
    $region7: #{tpu_custom_call.1} parent=1 // pred_check_branch
      %14 = sbr.rel (0) target = $region9
    $region8: #{tpu_custom_call.1} parent=1 // pred_region
      _
    $region9: #{tpu_custom_call.1} parent=1 // pred_fallthru
      _
    // Predicated region
    $region10: #{tpu_custom_call.1} parent=1 // pred_check
      _
    $region11: #{tpu_custom_call.1} parent=1 // pred_check_branch
      %16 = sbr.rel (0) target = $region13
    $region12: #{tpu_custom_call.1} parent=1 // pred_region
      _
    $region13: #{tpu_custom_call.1} parent=1 // pred_fallthru
      _
    // Predicated region
    $region14: #{tpu_custom_call.1} parent=1 // pred_check
      _
    $region15: #{tpu_custom_call.1} parent=1 // pred_check_branch
      %18 = sbr.rel (0) target = $region17
    $region16: #{tpu_custom_call.1} parent=1 // pred_region
      _
    $region17: #{tpu_custom_call.1} parent=1 // pred_fallthru
      _
    // Predicated region
    $region18: #{tpu_custom_call.1} parent=1 // pred_check
      _
    $region19: #{tpu_custom_call.1} parent=1 // pred_check_branch
      %20 = sbr.rel (0) target = $region21
    $region20: #{tpu_custom_call.1} parent=1 // pred_region
      _
    $region21: #{tpu_custom_call.1} parent=1 // pred_fallthru
      _
    %v21 = vld [vmem:[%s0] sm:$0xff]
    %v22 = vld [vmem:[%s0 + $0x8] sm:$0xff]
    %v23 = vld [vmem:[%s1] sm:$0xff]
    %v24 = vld [vmem:[%s1 + $0x8] sm:$0xff]
    %v25 = vld [vmem:[%s1 + $0x10] sm:$0xff]
    %v26 = vld [vmem:[%s1 + $0x18] sm:$0xff]
    %v27 = vld [vmem:[%s1 + $0x20] sm:$0xff]
    %v28 = vld [vmem:[%s1 + $0x28] sm:$0xff]
    %v29 = vld [vmem:[%s1 + $0x30] sm:$0xff]
    %v30 = vld [vmem:[%s1 + $0x38] sm:$0xff]
    %v31 = vld [vmem:[%s2] sm:$0x3]
    %v33 = vlaneseq
    %v34 = vshrl.u32 %v33, 7
    %v35 = vsub.s32 0, %v34
    %v36 = vrot.slane %v31, %v35
    %v37 = vlaneseq
    %v38 = vshrl.u32 %v37, 7
    %v39 = vsub.s32 1, %v38
    %v40 = vrot.slane %v31, %v39
    %vm43 = vcmask 261120
    %v45 = vsel %vm43, %v21, 0
    %v48 = vsel %vm43, %v22, 0
    %50 = vmatprep.subr.mxu0 0.0
    %51 = vmatpush1.msra.mxu0 0.0
    %52 = vmatprep.subr.mxu0 0.0
    %53 = vmatpush1.msra.mxu0 0.0
    %54 = vmatprep.subr.mxu0 0.0
    %55 = vmatpush1.msra.mxu0 0.0
    %56 = vmatprep.subr.mxu0 0.0
    %57 = vmatpush1.msra.mxu0 0.0
    %58 = vmatprep.subr.mxu0 0.0
    %59 = vmatpush1.msra.mxu0 0.0
    %60 = vmatprep.subr.mxu0 0.0
    %61 = vmatpush1.msra.mxu0 0.0
    %62 = vmatprep.subr.mxu0 0.0
    %63 = vmatpush1.msra.mxu0 0.0
    %64 = vmatprep.subr.mxu0 0.0
    %65 = vmatpush1.msra.mxu0 0.0
    %66 = vmatprep.subr.mxu0 0.0
    %67 = vmatpush1.msra.mxu0 0.0
    %68 = vmatprep.subr.mxu0 0.0
    %69 = vmatpush1.msra.mxu0 0.0
    %70 = vmatprep.subr.mxu0 0.0
    %71 = vmatpush1.msra.mxu0 0.0
    %72 = vmatprep.subr.mxu0 0.0
    %73 = vmatpush1.msra.mxu0 0.0
    %74 = vmatprep.subr.mxu0 %v30
    %75 = vmatpush1.msra.mxu0 %v29
    %76 = vmatprep.subr.mxu0 %v28
    %77 = vmatpush1.msra.mxu0 %v27
    %78 = vmatprep.subr.mxu0 %v26
    %79 = vmatpush1.msra.mxu0 %v25
    %80 = vmatprep.subr.mxu0 %v24
    %81 = vmatpush1.msra.mxu0 %v23
    %82 = vmatprep.subr.mxu0 0.0
    %83 = vmatpush2.msra.mxu0 0.0
    %84 = vmatprep.subr.mxu0 0.0
    %85 = vmatpush2.msra.mxu0 0.0
    %86 = vmatprep.subr.mxu0 0.0
    %87 = vmatpush2.msra.mxu0 0.0
    %88 = vmatprep.subr.mxu0 0.0
    %89 = vmatpush2.msra.mxu0 0.0
    %90 = vmatprep.subr.mxu0 0.0
    %91 = vmatpush2.msra.mxu0 0.0
    %92 = vmatprep.subr.mxu0 0.0
    %93 = vmatpush2.msra.mxu0 0.0
    %94 = vmatprep.subr.mxu0 0.0
    %95 = vmatpush2.msra.mxu0 0.0
    %96 = vmatprep.subr.mxu0 0.0
    %97 = vmatpush2.msra.mxu0 0.0
    %98 = vmatprep.subr.mxu0 0.0
    %99 = vmatpush2.msra.mxu0 0.0
    %100 = vmatprep.subr.mxu0 0.0
    %101 = vmatpush2.msra.mxu0 0.0
    %102 = vmatprep.subr.mxu0 0.0
    %103 = vmatpush2.msra.mxu0 0.0
    %104 = vmatprep.subr.mxu0 0.0
    %105 = vmatpush2.msra.mxu0 0.0
    %106 = vmatprep.subr.mxu0 0.0
    %107 = vmatpush2.msra.mxu0 0.0
    %108 = vmatprep.subr.mxu0 0.0
    %109 = vmatpush2.msra.mxu0 0.0
    %110 = vmatprep.subr.mxu0 0.0
    %111 = vmatpush2.msra.mxu0 0.0
    %112 = vmatprep.subr.mxu0 0.0
    %113 = vmatpush2.msra.mxu0 0.0
    %114 = vmatprep.mubr.f32.mxu0 0.0
    %115 = vmatmul.mubr.f32.gmra.mxu0 %v45
    %v116 = vpop.f32.mrf.mxu0
    %v117 = vadd.f32 %v36, %v116
    %v118 = vpop.f32.mrf.mxu0
    %v119 = vadd.f32 %v40, %v118
    %120 = vmatprep.mubr.f32.mxu0 0.0
    %121 = vmatmul.mubr.f32.gmra.mxu0 %v48
    %v122 = vpop.f32.mrf.mxu0
    %v123 = vadd.f32 %v36, %v122
    %v124 = vpop.f32.mrf.mxu0
    %v125 = vadd.f32 %v40, %v124
    %126 = vdwg.mxu0
    %v127 = vmul.f32 %v117, 0.5
    %v128 = vmul.f32 %v119, 0.5
    %v129 = vmul.f32 %v123, 0.5
    %v130 = vmul.f32 %v125, 0.5
    %v131 = vmul.f32 %v117, 0.70710677
    %v132 = vmul.f32 %v119, 0.70710677
    %v133 = vmul.f32 %v123, 0.70710677
    %v134 = vmul.f32 %v125, 0.70710677
    %v135 = verf.f32.pop %v131
    %v136 = verf.f32.pop %v132
    %v137 = verf.f32.pop %v133
    %v138 = verf.f32.pop %v134
    %v139 = vadd.f32 %v135, 1.0
    %v140 = vadd.f32 %v136, 1.0
    %v141 = vadd.f32 %v137, 1.0
    %v142 = vadd.f32 %v138, 1.0
    %v143 = vmul.f32 %v127, %v139
    %v144 = vmul.f32 %v128, %v140
    %v145 = vmul.f32 %v129, %v141
    %v146 = vmul.f32 %v130, %v142
    %v147 = vld [vmem:[%s3] sm:$0xff]
    %v148 = vld [vmem:[%s3 + $0x8] sm:$0xff]
    %v149 = vld [vmem:[%s3 + $0x10] sm:$0xff]
    %v150 = vld [vmem:[%s3 + $0x18] sm:$0xff]
    %v151 = vld [vmem:[%s3 + $0x20] sm:$0xff]
    %v152 = vld [vmem:[%s3 + $0x28] sm:$0xff]
    %v153 = vld [vmem:[%s3 + $0x30] sm:$0xff]
    %v154 = vld [vmem:[%s3 + $0x38] sm:$0xff]
    %v155 = vld [vmem:[%s3 + $0x40] sm:$0xff]
    %v156 = vld [vmem:[%s3 + $0x48] sm:$0xff]
    %v157 = vld [vmem:[%s3 + $0x50] sm:$0xff]
    %v158 = vld [vmem:[%s3 + $0x58] sm:$0xff]
    %v159 = vld [vmem:[%s3 + $0x60] sm:$0xff]
    %v160 = vld [vmem:[%s3 + $0x68] sm:$0xff]
    %v161 = vld [vmem:[%s3 + $0x70] sm:$0xff]
    %v162 = vld [vmem:[%s3 + $0x78] sm:$0xff]
    %v163 = vld [vmem:[%s3 + $0x80] sm:$0xff]
    %v164 = vld [vmem:[%s3 + $0x88] sm:$0xff]
    %v165 = vld [vmem:[%s3 + $0x90] sm:$0xff]
    %v166 = vld [vmem:[%s3 + $0x98] sm:$0xff]
    %v167 = vld [vmem:[%s3 + $0xa0] sm:$0xff]
    %v168 = vld [vmem:[%s3 + $0xa8] sm:$0xff]
    %v169 = vld [vmem:[%s3 + $0xb0] sm:$0xff]
    %v170 = vld [vmem:[%s3 + $0xb8] sm:$0xff]
    %v171 = vld [vmem:[%s3 + $0xc0] sm:$0xff]
    %v172 = vld [vmem:[%s3 + $0xc8] sm:$0xff]
    %v173 = vld [vmem:[%s3 + $0xd0] sm:$0xff]
    %v174 = vld [vmem:[%s3 + $0xd8] sm:$0xff]
    %v175 = vld [vmem:[%s3 + $0xe0] sm:$0xff]
    %v176 = vld [vmem:[%s3 + $0xe8] sm:$0xff]
    %v177 = vld [vmem:[%s3 + $0xf0] sm:$0xff]
    %v178 = vld [vmem:[%s3 + $0xf8] sm:$0xff]
    %v179 = vld [vmem:[%s4] sm:$0xff]
    %181 = vset.pattern.permute.xlu0 0
    %182 = vperm.xlu0 %181, %v179
    %v183 = vpop.permute.xlu0 %182
    %185 = vxpose.xlu0.b32.start [1/16] %v147, 128
    %186 = vxpose.xlu0.b32.cont [2/16] %v148, 128
    %187 = vxpose.xlu0.b32.cont [3/16] %v149, 128
    %188 = vxpose.xlu0.b32.cont [4/16] %v150, 128
    %189 = vxpose.xlu0.b32.cont [5/16] %v151, 128
    %190 = vxpose.xlu0.b32.cont [6/16] %v152, 128
    %191 = vxpose.xlu0.b32.cont [7/16] %v153, 128
    %192 = vxpose.xlu0.b32.cont [8/16] %v154, 128
    %193 = vxpose.xlu0.b32.cont [9/16] %v155, 128
    %194 = vxpose.xlu0.b32.cont [10/16] %v156, 128
    %195 = vxpose.xlu0.b32.cont [11/16] %v157, 128
    %196 = vxpose.xlu0.b32.cont [12/16] %v158, 128
    %197 = vxpose.xlu0.b32.cont [13/16] %v159, 128
    %198 = vxpose.xlu0.b32.cont [14/16] %v160, 128
    %199 = vxpose.xlu0.b32.cont [15/16] %v161, 128
    %200 = vxpose.xlu0.b32.end [16/16] %v162, 128
    %v201 = vpop.trf.xlu0
    %v202 = vpop.trf.xlu0
    %v203 = vpop.trf.xlu0
    %v204 = vpop.trf.xlu0
    %v205 = vpop.trf.xlu0
    %v206 = vpop.trf.xlu0
    %v207 = vpop.trf.xlu0
    %v208 = vpop.trf.xlu0
    %v209 = vpop.trf.xlu0
    %v210 = vpop.trf.xlu0
    %v211 = vpop.trf.xlu0
    %v212 = vpop.trf.xlu0
    %v213 = vpop.trf.xlu0
    %v214 = vpop.trf.xlu0
    %v215 = vpop.trf.xlu0
    %v216 = vpop.trf.xlu0
    %217 = vxpose.xlu0.b32.start [1/16] %v163, 128
    %218 = vxpose.xlu0.b32.cont [2/16] %v164, 128
    %219 = vxpose.xlu0.b32.cont [3/16] %v165, 128
    %220 = vxpose.xlu0.b32.cont [4/16] %v166, 128
    %221 = vxpose.xlu0.b32.cont [5/16] %v167, 128
    %222 = vxpose.xlu0.b32.cont [6/16] %v168, 128
    %223 = vxpose.xlu0.b32.cont [7/16] %v169, 128
    %224 = vxpose.xlu0.b32.cont [8/16] %v170, 128
    %225 = vxpose.xlu0.b32.cont [9/16] %v171, 128
    %226 = vxpose.xlu0.b32.cont [10/16] %v172, 128
    %227 = vxpose.xlu0.b32.cont [11/16] %v173, 128
    %228 = vxpose.xlu0.b32.cont [12/16] %v174, 128
    %229 = vxpose.xlu0.b32.cont [13/16] %v175, 128
    %230 = vxpose.xlu0.b32.cont [14/16] %v176, 128
    %231 = vxpose.xlu0.b32.cont [15/16] %v177, 128
    %232 = vxpose.xlu0.b32.end [16/16] %v178, 128
    %v233 = vpop.trf.xlu0
    %v234 = vpop.trf.xlu0
    %v235 = vpop.trf.xlu0
    %v236 = vpop.trf.xlu0
    %v237 = vpop.trf.xlu0
    %v238 = vpop.trf.xlu0
    %v239 = vpop.trf.xlu0
    %v240 = vpop.trf.xlu0
    %v241 = vpop.trf.xlu0
    %v242 = vpop.trf.xlu0
    %v243 = vpop.trf.xlu0
    %v244 = vpop.trf.xlu0
    %v245 = vpop.trf.xlu0
    %v246 = vpop.trf.xlu0
    %v247 = vpop.trf.xlu0
    %v248 = vpop.trf.xlu0
    %249 = vmatprep.subr.mxu0 0.0
    %250 = vmatpush1.xpose.msra.mxu0 0.0
    %251 = vmatprep.subr.mxu0 0.0
    %252 = vmatpush1.xpose.msra.mxu0 0.0
    %253 = vmatprep.subr.mxu0 0.0
    %254 = vmatpush1.xpose.msra.mxu0 0.0
    %255 = vmatprep.subr.mxu0 0.0
    %256 = vmatpush1.xpose.msra.mxu0 0.0
    %257 = vmatprep.subr.mxu0 0.0
    %258 = vmatpush1.xpose.msra.mxu0 0.0
    %259 = vmatprep.subr.mxu0 0.0
    %260 = vmatpush1.xpose.msra.mxu0 0.0
    %261 = vmatprep.subr.mxu0 0.0
    %262 = vmatpush1.xpose.msra.mxu0 0.0
    %263 = vmatprep.subr.mxu0 0.0
    %264 = vmatpush1.xpose.msra.mxu0 0.0
    %265 = vmatprep.subr.mxu0 0.0
    %266 = vmatpush1.xpose.msra.mxu0 0.0
    %267 = vmatprep.subr.mxu0 0.0
    %268 = vmatpush1.xpose.msra.mxu0 0.0
    %269 = vmatprep.subr.mxu0 0.0
    %270 = vmatpush1.xpose.msra.mxu0 0.0
    %271 = vmatprep.subr.mxu0 0.0
    %272 = vmatpush1.xpose.msra.mxu0 0.0
    %273 = vmatprep.subr.mxu0 0.0
    %274 = vmatpush1.xpose.msra.mxu0 0.0
    %275 = vmatprep.subr.mxu0 0.0
    %276 = vmatpush1.xpose.msra.mxu0 0.0
    %277 = vmatprep.subr.mxu0 %v146
    %278 = vmatpush1.xpose.msra.mxu0 %v145
    %279 = vmatprep.subr.mxu0 %v144
    %280 = vmatpush1.xpose.msra.mxu0 %v143
    %281 = vmatprep.subr.mxu0 0.0
    %282 = vmatpush2.xpose.msra.mxu0 0.0
    %283 = vmatprep.subr.mxu0 0.0
    %284 = vmatpush2.xpose.msra.mxu0 0.0
    %285 = vmatprep.subr.mxu0 0.0
    %286 = vmatpush2.xpose.msra.mxu0 0.0
    %287 = vmatprep.subr.mxu0 0.0
    %288 = vmatpush2.xpose.msra.mxu0 0.0
    %289 = vmatprep.subr.mxu0 0.0
    %290 = vmatpush2.xpose.msra.mxu0 0.0
    %291 = vmatprep.subr.mxu0 0.0
    %292 = vmatpush2.xpose.msra.mxu0 0.0
    %293 = vmatprep.subr.mxu0 0.0
    %294 = vmatpush2.xpose.msra.mxu0 0.0
    %295 = vmatprep.subr.mxu0 0.0
    %296 = vmatpush2.xpose.msra.mxu0 0.0
    %297 = vmatprep.subr.mxu0 0.0
    %298 = vmatpush2.xpose.msra.mxu0 0.0
    %299 = vmatprep.subr.mxu0 0.0
    %300 = vmatpush2.xpose.msra.mxu0 0.0
    %301 = vmatprep.subr.mxu0 0.0
    %302 = vmatpush2.xpose.msra.mxu0 0.0
    %303 = vmatprep.subr.mxu0 0.0
    %304 = vmatpush2.xpose.msra.mxu0 0.0
    %305 = vmatprep.subr.mxu0 0.0
    %306 = vmatpush2.xpose.msra.mxu0 0.0
    %307 = vmatprep.subr.mxu0 0.0
    %308 = vmatpush2.xpose.msra.mxu0 0.0
    %309 = vmatprep.subr.mxu0 0.0
    %310 = vmatpush2.xpose.msra.mxu0 0.0
    %311 = vmatprep.subr.mxu0 0.0
    %312 = vmatpush2.xpose.msra.mxu0 0.0
    %313 = vmatprep.mubr.f32.mxu0 %v233
    %314 = vmatmul.mubr.f32.gmra.mxu0 %v201
    %v315 = vpop.f32.mrf.mxu0
    %v316 = vadd.f32 %v183, %v315
    %v317 = vpop.f32.mrf.mxu0
    %318 = vdwg.mxu0
    %vm319 = vcmask 130048
    %320 = vst.msk [vmem:[#allocation2] sm:$0xff] %vm319, %v316
    // Predicated region
    $region22: #{tpu_custom_call.1} parent=1 // pred_check
      _
    $region23: #{tpu_custom_call.1} parent=1 // pred_check_branch
      %322 = sbr.rel (0) target = $region25
    $region24: #{tpu_custom_call.1} parent=1 // pred_region
      %s324 = ssub.s32 128, 128
      %325 = vsyncadd [#allocation3], %s324
      %s327 = sshll.u32 [#allocation2], 4
      %s328 = int_to_ptr.vmem [resolvable:$true] %s327
      %330 = dma.vmem_to_hbm [thread:$0]  %s328, 128, %s5, [#allocation3]
    $region25: #{tpu_custom_call.1} parent=1 // pred_fallthru
      _
    // Predicated region
    $region26: #{tpu_custom_call.1} parent=1 // pred_check
      _
    $region27: #{tpu_custom_call.1} parent=1 // pred_check_branch
      %332 = sbr.rel (0) target = $region29
    $region28: #{tpu_custom_call.1} parent=1 // pred_region
      %333 = dma.done [#allocation3], 128
    $region29: #{tpu_custom_call.1} parent=1 // pred_fallthru
      _
    %334 = vsyncpa [#allocation3], 1

</llo_original>
